<compile_context>
chip_gen: v7x
topology: tpu7x:2x2x1
jax: 0.10.0
libtpu: 0.0.40
codegen_flags: <defaults>
</compile_context>

<pallas_src>
import jax
import jax.numpy as jnp
from jax.experimental import pallas as pl
from jax.experimental.pallas import tpu as pltpu

LAYER_SIZE = 64


def _round_up(x, m):
    return ((x + m - 1) // m) * m


def _fused_kernel(state_ref, action_ref, inv_var_ref, qmask_ref,
                  w1_ref, b1_ref, w2_ref, b2_ref, w3_ref, b3_ref,
                  out_ref):
    """One batch tile of the fused actor+critic forward pass (transposed form).

    Shapes (TB = batch tile, in lanes):
      state_ref  [S, TB]        action_ref [A, TB]
      w1 [128, S] b1 [128, 1]   w2 [128, 128] b2 [128, 1]
      w3 [HEAD, 128] b3 [HEAD, 1]   (HEAD = 16: critic rows 0..A-1, zeros,
                                      actor-mean rows 8..8+A-1)
      out_ref [OUT_ROWS, TB]    (rows 0..A-1 = value, row A = quad, rest 0)
    """
    A = action_ref.shape[0]
    out_rows = out_ref.shape[0]

    x = state_ref[...]                                               # [S, TB]
    h = jnp.tanh(jnp.dot(w1_ref[...], x,
                         preferred_element_type=jnp.float32) + b1_ref[...])
    h = jnp.tanh(jnp.dot(w2_ref[...], h,
                         preferred_element_type=jnp.float32) + b2_ref[...])
    y = jnp.tanh(jnp.dot(w3_ref[...], h,
                         preferred_element_type=jnp.float32) + b3_ref[...])  # [HEAD, TB]

    mean = y[out_rows:out_rows + A, :]                               # actor mean [A, TB]
    diff = action_ref[...] - mean
    quad = jnp.sum(diff * diff * inv_var_ref[...],
                   axis=0, keepdims=True)                            # [1, TB]

    # Rows [A:out_rows) of y are exactly zero (zero-padded w3/b3, tanh(0)=0),
    # so adding quad through a constant one-hot row mask lands it on row A.
    out_ref[...] = y[:out_rows, :] + qmask_ref[...] * quad


def _fuse_params(actor_params, critic_params, action_dim, out_rows):
    """Build fused, transposed ([out, in]) weights for the actor+critic pair."""
    aw1, ab1, aw2, ab2, aw3, ab3 = actor_params
    cw1, cb1, cw2, cb2, cw3, cb3 = critic_params
    H = aw1.shape[1]                       # 64
    HF = 2 * H                             # 128-wide fused hidden
    A = action_dim
    act_off = out_rows                     # actor-mean rows start here
    head_rows = _round_up(act_off + A, 8)  # fused head rows (16 for A=4)
    assert A + 1 <= out_rows, "quad row must fit inside the stored output rows"

    # Layer 1: [HF, S] (actor hidden rows 0..H-1, critic hidden rows H..2H-1).
    w1 = jnp.concatenate([aw1.T, cw1.T], axis=0).astype(jnp.float32)
    b1 = jnp.concatenate([ab1, cb1], axis=1).reshape(HF, 1).astype(jnp.float32)
    # Layer 2: block-diagonal [HF, HF].
    w2 = jnp.zeros((HF, HF), jnp.float32)
    w2 = w2.at[:H, :H].set(aw2.T).at[H:, H:].set(cw2.T)
    b2 = jnp.concatenate([ab2, cb2], axis=1).reshape(HF, 1).astype(jnp.float32)
    # Layer 3 (fused head): critic rows [0:A), quad slot / padding rows [A:8),
    # actor-mean rows [8:8+A), everything else zero.
    w3 = jnp.zeros((head_rows, HF), jnp.float32)
    w3 = w3.at[:A, H:].set(cw3.T).at[act_off:act_off + A, :H].set(aw3.T)
    b3 = jnp.zeros((head_rows, 1), jnp.float32)
    b3 = b3.at[:A, 0].set(cb3.reshape(-1)).at[act_off:act_off + A, 0].set(ab3.reshape(-1))
    return w1, b1, w2, b2, w3, b3


def actor_critic_evaluate(state, action, action_var, actor_params, critic_params,
                          *, block_b=1024):
    """Returns (action_logprobs [B], state_value [B*A], dist_entropy [B])."""
    B, S = state.shape
    A = action.shape[1]

    out_rows = _round_up(A + 1, 8)         # value rows + quad row, sublane-padded
    fused = _fuse_params(actor_params, critic_params, A, out_rows)
    inv_var = (1.0 / action_var).reshape(A, 1).astype(jnp.float32)
    qmask = jnp.zeros((out_rows, 1), jnp.float32).at[A, 0].set(1.0)

    # Batch tiling: batch lives in LANES, so tiles are multiples of 128.
    # Choose the tile to avoid the round_up(B, block_b) padding cliff and force
    # >=2 grid steps when possible so v7x's two TensorCores both get work.
    Bp = _round_up(B, 128)
    n_tiles = -(-Bp // block_b)
    if Bp >= 256:
        n_tiles = max(n_tiles, 2)
    TB = _round_up(-(-Bp // n_tiles), 128)
    grid = -(-Bp // TB)
    Bp = grid * TB

    # Layout plumbing (sanctioned wrapper-side transpose): [B, S] -> [S, Bp].
    pad = Bp - B
    state_t = jnp.pad(state.astype(jnp.float32).T, ((0, 0), (0, pad)))
    action_t = jnp.pad(action.astype(jnp.float32).T, ((0, 0), (0, pad)))

    def stream_spec(rows):                       # batch-streamed, lane-dense
        return pl.BlockSpec((rows, TB), lambda i: (0, i))

    def const_spec(shape):                       # resident (constant index_map)
        return pl.BlockSpec(shape, lambda i: (0, 0))

    slab = pl.pallas_call(
        _fused_kernel,
        out_shape=jax.ShapeDtypeStruct((out_rows, Bp), jnp.float32),
        grid_spec=pltpu.PrefetchScalarGridSpec(
            num_scalar_prefetch=0,
            grid=(grid,),
            in_specs=[
                stream_spec(S),                  # state^T tile
                stream_spec(A),                  # action^T tile
                const_spec((A, 1)),              # 1/var (per sublane)
                const_spec((out_rows, 1)),       # one-hot quad-row mask
                const_spec(fused[0].shape),      # w1 fused  [128, S]
                const_spec(fused[1].shape),      # b1 fused  [128, 1]
                const_spec(fused[2].shape),      # w2 fused  [128, 128]
                const_spec(fused[3].shape),      # b2 fused  [128, 1]
                const_spec(fused[4].shape),      # w3 fused  [16, 128]
                const_spec(fused[5].shape),      # b3 fused  [16, 1]
            ],
            out_specs=pl.BlockSpec((out_rows, TB), lambda i: (0, i)),
        ),
        compiler_params=pltpu.CompilerParams(
            dimension_semantics=("parallel",)),
    )(state_t, action_t, inv_var, qmask, *fused)

    value_t = slab[:A, :B]                       # [A, B]  critic(state)^T
    quad = slab[A, :B]                           # [B]     (a-mu)^T diag(1/var) (a-mu)
    value = value_t.T.reshape(-1)                # row-major [B*A], matches reshape(-1)

    # Data-independent Gaussian constants stay outside the kernel.
    log_two_pi = jnp.log(jnp.float32(2.0 * jnp.pi))
    log_det = jnp.sum(jnp.log(action_var))
    logprob = -0.5 * (quad + A * log_two_pi + log_det)
    entropy = jnp.full((B,), 0.5 * A * (1.0 + log_two_pi) + 0.5 * log_det,
                       dtype=jnp.float32)
    return logprob, value, entropy


def _init_mlp_params(key, state_dim, action_dim, size=LAYER_SIZE):
    """Deterministic init mimicking nn.Linear's U(-1/sqrt(fan_in), 1/sqrt(fan_in)).

    Weights are stored as [in_features, out_features]; biases as [1, out]."""
    dims = [(state_dim, size), (size, size), (size, action_dim)]
    params = []
    for (fan_in, fan_out) in dims:
        key, kw, kb = jax.random.split(key, 3)
        bound = 1.0 / jnp.sqrt(jnp.float32(fan_in))
        w = jax.random.uniform(kw, (fan_in, fan_out), jnp.float32, -bound, bound)
        b = jax.random.uniform(kb, (1, fan_out), jnp.float32, -bound, bound)
        params += [w, b]
    return key, tuple(params)


def _reference_evaluate(state, action, action_var, actor_params, critic_params):
    def mlp(x, p):
        w1, b1, w2, b2, w3, b3 = p
        h = jnp.tanh(x @ w1 + b1)
        h = jnp.tanh(h @ w2 + b2)
        return jnp.tanh(h @ w3 + b3)

    mean = mlp(state, actor_params)
    value = mlp(state, critic_params).reshape(-1)
    A = mean.shape[-1]
    log_two_pi = jnp.log(2.0 * jnp.pi)
    log_det = jnp.sum(jnp.log(action_var))
    diff = action - mean
    quad = jnp.sum(diff * diff / action_var[None, :], axis=-1)
    logprob = -0.5 * (quad + A * log_two_pi + log_det)
    entropy = jnp.full((state.shape[0],),
                       0.5 * A * (1.0 + log_two_pi) + 0.5 * log_det,
                       dtype=jnp.float32)
    return logprob, value, entropy


if __name__ == "__main__":
    B, STATE_DIM, ACTION_DIM = 8, 16, 4
    ACTION_STD = 0.5

    key = jax.random.PRNGKey(0)
    key, actor_params = _init_mlp_params(key, STATE_DIM, ACTION_DIM)
    key, critic_params = _init_mlp_params(key, STATE_DIM, ACTION_DIM)

    key, ks, ka = jax.random.split(key, 3)
    state = jax.random.normal(ks, (B, STATE_DIM), jnp.float32)
    action = jax.random.normal(ka, (B, ACTION_DIM), jnp.float32)
    action_var = jnp.full((ACTION_DIM,), ACTION_STD * ACTION_STD, jnp.float32)

    # TODO(synk): act()'s MultivariateNormal sampling path is not implemented;
    # only evaluate() (the heavy training-loop call) is fused here.
    eval_fn = jax.jit(actor_critic_evaluate)
    logprob, value, entropy = eval_fn(state, action, action_var,
                                      actor_params, critic_params)
    jax.block_until_ready((logprob, value, entropy))

    ref_lp, ref_v, ref_e = _reference_evaluate(
        state, action, action_var, actor_params, critic_params)

    assert logprob.shape == (B,) and entropy.shape == (B,)
    assert value.shape == (B * ACTION_DIM,)
    assert jnp.allclose(logprob, ref_lp, atol=2e-4, rtol=2e-4)
    assert jnp.allclose(value, ref_v, atol=2e-4, rtol=2e-4)
    assert jnp.allclose(entropy, ref_e, atol=2e-4, rtol=2e-4)

    print("KERNEL_OK")
</pallas_src>

<mosaic_0001>
module attributes {stable_mosaic.version = 11 : i64} {
  func.func @_fused_kernel(%arg0: i32, %arg1: memref<16x128xf32, #tpu.memory_space<vmem>>, %arg2: memref<4x128xf32, #tpu.memory_space<vmem>>, %arg3: memref<4x1xf32, #tpu.memory_space<vmem>>, %arg4: memref<8x1xf32, #tpu.memory_space<vmem>>, %arg5: memref<128x16xf32, #tpu.memory_space<vmem>>, %arg6: memref<128x1xf32, #tpu.memory_space<vmem>>, %arg7: memref<128x128xf32, #tpu.memory_space<vmem>>, %arg8: memref<128x1xf32, #tpu.memory_space<vmem>>, %arg9: memref<16x128xf32, #tpu.memory_space<vmem>>, %arg10: memref<16x1xf32, #tpu.memory_space<vmem>>, %arg11: memref<8x128xf32, #tpu.memory_space<vmem>>) attributes {dimension_semantics = [#tpu.dimension_semantics<parallel>], iteration_bounds = array<i64: 1>, scalar_prefetch = 0 : i64, scratch_operands = 0 : i64, tpu.core_type = #tpu.core_type<tc>, window_params = [{transform_indices = @transform_0, window_bounds = array<i64: 16, 128>}, {transform_indices = @transform_1, window_bounds = array<i64: 4, 128>}, {pipeline_mode = #tpu.pipeline_mode<synchronous>, transform_indices = @transform_2, window_bounds = array<i64: 4, 1>}, {pipeline_mode = #tpu.pipeline_mode<synchronous>, transform_indices = @transform_3, window_bounds = array<i64: 8, 1>}, {pipeline_mode = #tpu.pipeline_mode<synchronous>, transform_indices = @transform_4, window_bounds = array<i64: 128, 16>}, {pipeline_mode = #tpu.pipeline_mode<synchronous>, transform_indices = @transform_5, window_bounds = array<i64: 128, 1>}, {pipeline_mode = #tpu.pipeline_mode<synchronous>, transform_indices = @transform_6, window_bounds = array<i64: 128, 128>}, {pipeline_mode = #tpu.pipeline_mode<synchronous>, transform_indices = @transform_7, window_bounds = array<i64: 128, 1>}, {pipeline_mode = #tpu.pipeline_mode<synchronous>, transform_indices = @transform_8, window_bounds = array<i64: 16, 128>}, {pipeline_mode = #tpu.pipeline_mode<synchronous>, transform_indices = @transform_9, window_bounds = array<i64: 16, 1>}, {transform_indices = @transform_10, window_bounds = array<i64: 8, 128>}]} {
    %c0 = arith.constant 0 : index
    %c0_0 = arith.constant 0 : index
    %0 = vector.load %arg1[%c0, %c0_0] : memref<16x128xf32, #tpu.memory_space<vmem>>, vector<16x128xf32>
    %c0_1 = arith.constant 0 : index
    %c0_2 = arith.constant 0 : index
    %1 = vector.load %arg5[%c0_1, %c0_2] : memref<128x16xf32, #tpu.memory_space<vmem>>, vector<128x16xf32>
    %cst = arith.constant dense<0.000000e+00> : vector<128x128xf32>
    %2 = tpu.matmul %1, %0, %cst {dimension_numbers = #tpu.dot_dimension_numbers<[1], [0], [0], [1], [0, 0, 1, 1], [], []>} : vector<128x16xf32>, vector<16x128xf32>, vector<128x128xf32> -> vector<128x128xf32>
    %c0_3 = arith.constant 0 : index
    %c0_4 = arith.constant 0 : index
    %3 = vector.load %arg6[%c0_3, %c0_4] : memref<128x1xf32, #tpu.memory_space<vmem>>, vector<128x1xf32>
    %4 = vector.broadcast %3 : vector<128x1xf32> to vector<128x128xf32>
    %5 = arith.addf %2, %4 : vector<128x128xf32>
    %6 = math.tanh %5 : vector<128x128xf32>
    %c0_5 = arith.constant 0 : index
    %c0_6 = arith.constant 0 : index
    %7 = vector.load %arg7[%c0_5, %c0_6] : memref<128x128xf32, #tpu.memory_space<vmem>>, vector<128x128xf32>
    %cst_7 = arith.constant dense<0.000000e+00> : vector<128x128xf32>
    %8 = tpu.matmul %7, %6, %cst_7 {dimension_numbers = #tpu.dot_dimension_numbers<[1], [0], [0], [1], [0, 0, 1, 1], [], []>} : vector<128x128xf32>, vector<128x128xf32>, vector<128x128xf32> -> vector<128x128xf32>
    %c0_8 = arith.constant 0 : index
    %c0_9 = arith.constant 0 : index
    %9 = vector.load %arg8[%c0_8, %c0_9] : memref<128x1xf32, #tpu.memory_space<vmem>>, vector<128x1xf32>
    %10 = vector.broadcast %9 : vector<128x1xf32> to vector<128x128xf32>
    %11 = arith.addf %8, %10 : vector<128x128xf32>
    %12 = math.tanh %11 : vector<128x128xf32>
    %c0_10 = arith.constant 0 : index
    %c0_11 = arith.constant 0 : index
    %13 = vector.load %arg9[%c0_10, %c0_11] : memref<16x128xf32, #tpu.memory_space<vmem>>, vector<16x128xf32>
    %cst_12 = arith.constant dense<0.000000e+00> : vector<16x128xf32>
    %14 = tpu.matmul %13, %12, %cst_12 {dimension_numbers = #tpu.dot_dimension_numbers<[1], [0], [0], [1], [0, 0, 1, 1], [], []>} : vector<16x128xf32>, vector<128x128xf32>, vector<16x128xf32> -> vector<16x128xf32>
    %c0_13 = arith.constant 0 : index
    %c0_14 = arith.constant 0 : index
    %15 = vector.load %arg10[%c0_13, %c0_14] : memref<16x1xf32, #tpu.memory_space<vmem>>, vector<16x1xf32>
    %16 = vector.broadcast %15 : vector<16x1xf32> to vector<16x128xf32>
    %17 = arith.addf %14, %16 : vector<16x128xf32>
    %18 = math.tanh %17 : vector<16x128xf32>
    %19 = vector.extract_strided_slice %18 {offsets = [8, 0], sizes = [4, 128], strides = [1, 1]} : vector<16x128xf32> to vector<4x128xf32>
    %c0_15 = arith.constant 0 : index
    %c0_16 = arith.constant 0 : index
    %20 = vector.load %arg2[%c0_15, %c0_16] : memref<4x128xf32, #tpu.memory_space<vmem>>, vector<4x128xf32>
    %21 = arith.subf %20, %19 : vector<4x128xf32>
    %22 = arith.mulf %21, %21 : vector<4x128xf32>
    %c0_17 = arith.constant 0 : index
    %c0_18 = arith.constant 0 : index
    %23 = vector.load %arg3[%c0_17, %c0_18] : memref<4x1xf32, #tpu.memory_space<vmem>>, vector<4x1xf32>
    %24 = vector.broadcast %23 : vector<4x1xf32> to vector<4x128xf32>
    %25 = arith.mulf %22, %24 : vector<4x128xf32>
    %cst_19 = arith.constant dense<0.000000e+00> : vector<128xf32>
    %26 = vector.multi_reduction <add>, %25, %cst_19 [0] : vector<4x128xf32> to vector<128xf32>
    %27 = vector.shape_cast %26 : vector<128xf32> to vector<1x128xf32>
    %28 = vector.extract_strided_slice %18 {offsets = [0, 0], sizes = [8, 128], strides = [1, 1]} : vector<16x128xf32> to vector<8x128xf32>
    %c0_20 = arith.constant 0 : index
    %c0_21 = arith.constant 0 : index
    %29 = vector.load %arg4[%c0_20, %c0_21] : memref<8x1xf32, #tpu.memory_space<vmem>>, vector<8x1xf32>
    %30 = vector.broadcast %29 : vector<8x1xf32> to vector<8x128xf32>
    %31 = vector.broadcast %27 : vector<1x128xf32> to vector<8x128xf32>
    %32 = arith.mulf %30, %31 : vector<8x128xf32>
    %33 = arith.addf %28, %32 : vector<8x128xf32>
    %c0_22 = arith.constant 0 : index
    %c0_23 = arith.constant 0 : index
    %34 = vector.load %arg11[%c0_22, %c0_23] : memref<8x128xf32, #tpu.memory_space<vmem>>, vector<8x128xf32>
    tpu.vector_store %arg11[%c0_22, %c0_23], %33 {strides = array<i32>} : memref<8x128xf32, #tpu.memory_space<vmem>>, vector<8x128xf32>,
    return
  }
  func.func @transform_0(%arg0: i32) -> (i32, i32) {
    %c0_i32 = arith.constant 0 : i32
    %c0_i32_0 = arith.constant 0 : i32
    return %c0_i32, %arg0 : i32, i32
  }
  func.func @transform_1(%arg0: i32) -> (i32, i32) {
    %c0_i32 = arith.constant 0 : i32
    %c0_i32_0 = arith.constant 0 : i32
    return %c0_i32, %arg0 : i32, i32
  }
  func.func @transform_2(%arg0: i32) -> (i32, i32) {
    %c0_i32 = arith.constant 0 : i32
    %c0_i32_0 = arith.constant 0 : i32
    %c0_i32_1 = arith.constant 0 : i32
    return %c0_i32, %c0_i32_0 : i32, i32
  }
  func.func @transform_3(%arg0: i32) -> (i32, i32) {
    %c0_i32 = arith.constant 0 : i32
    %c0_i32_0 = arith.constant 0 : i32
    %c0_i32_1 = arith.constant 0 : i32
    return %c0_i32, %c0_i32_0 : i32, i32
  }
  func.func @transform_4(%arg0: i32) -> (i32, i32) {
    %c0_i32 = arith.constant 0 : i32
    %c0_i32_0 = arith.constant 0 : i32
    %c0_i32_1 = arith.constant 0 : i32
    return %c0_i32, %c0_i32_0 : i32, i32
  }
  func.func @transform_5(%arg0: i32) -> (i32, i32) {
    %c0_i32 = arith.constant 0 : i32
    %c0_i32_0 = arith.constant 0 : i32
    %c0_i32_1 = arith.constant 0 : i32
    return %c0_i32, %c0_i32_0 : i32, i32
  }
  func.func @transform_6(%arg0: i32) -> (i32, i32) {
    %c0_i32 = arith.constant 0 : i32
    %c0_i32_0 = arith.constant 0 : i32
    %c0_i32_1 = arith.constant 0 : i32
    return %c0_i32, %c0_i32_0 : i32, i32
  }
  func.func @transform_7(%arg0: i32) -> (i32, i32) {
    %c0_i32 = arith.constant 0 : i32
    %c0_i32_0 = arith.constant 0 : i32
    %c0_i32_1 = arith.constant 0 : i32
    return %c0_i32, %c0_i32_0 : i32, i32
  }
  func.func @transform_8(%arg0: i32) -> (i32, i32) {
    %c0_i32 = arith.constant 0 : i32
    %c0_i32_0 = arith.constant 0 : i32
    %c0_i32_1 = arith.constant 0 : i32
    return %c0_i32, %c0_i32_0 : i32, i32
  }
  func.func @transform_9(%arg0: i32) -> (i32, i32) {
    %c0_i32 = arith.constant 0 : i32
    %c0_i32_0 = arith.constant 0 : i32
    %c0_i32_1 = arith.constant 0 : i32
    return %c0_i32, %c0_i32_0 : i32, i32
  }
  func.func @transform_10(%arg0: i32) -> (i32, i32) {
    %c0_i32 = arith.constant 0 : i32
    %c0_i32_0 = arith.constant 0 : i32
    return %c0_i32, %arg0 : i32, i32
  }
}

</mosaic_0001>

<llo_original>
// kernel: actor_critic_evaluate.1
$region0: #{actor_critic_evaluate.1}
  #allocation0 [shape = 'u32[]', space=smem, size = 0x4, offset = 0x4, fixed_abs, tag = 'smem constant byte address 0x4 - core index']
  #allocation1 [shape = 'u32[144,128]{1,0:T(1,128)}', space=vmem, size = 0x12000, scoped, tag = 'internal scratch']
  %s0 = inlined_call_operand.vmem [shape: f32[16,128], index: 0, kind: input, shape index: {}]
  %s1 = inlined_call_operand.vmem [shape: f32[4,128], index: 1, kind: input, shape index: {}]
  %s2 = inlined_call_operand.vmem [shape: f32[4,1], index: 2, kind: input, shape index: {}]
  %s3 = inlined_call_operand.vmem [shape: f32[8,1], index: 3, kind: input, shape index: {}]
  %s4 = inlined_call_operand.vmem [shape: f32[128,16], index: 4, kind: input, shape index: {}]
  %s5 = inlined_call_operand.vmem [shape: f32[128,1], index: 5, kind: input, shape index: {}]
  %s6 = inlined_call_operand.vmem [shape: f32[128,128], index: 6, kind: input, shape index: {}]
  %s7 = inlined_call_operand.vmem [shape: f32[128,1], index: 7, kind: input, shape index: {}]
  %s8 = inlined_call_operand.vmem [shape: f32[16,128], index: 8, kind: input, shape index: {}]
  %s9 = inlined_call_operand.vmem [shape: f32[16,1], index: 9, kind: input, shape index: {}]
  %s10 = inlined_call_operand.vmem [shape: f32[8,128], index: 10, kind: output, shape index: {}]
  %s11 = sld [smem:[#allocation0]]
  $region50: #{actor_critic_evaluate.1} parent=0
    _
  %s13 = ssub.s32 1, %s11
  %s14 = scalar_select 0, %s13, %s11
  // Predicated region
  $region2: #{actor_critic_evaluate.1} parent=0 // pred_check
    _
  $region3: #{actor_critic_evaluate.1} parent=0 // pred_check_branch
    %16 = sbr.rel (0) target = $region5
  $region4: #{actor_critic_evaluate.1} parent=0 // pred_region
    _
  $region5: #{actor_critic_evaluate.1} parent=0 // pred_fallthru
    _
  // Predicated region
  $region6: #{actor_critic_evaluate.1} parent=0 // pred_check
    _
  $region7: #{actor_critic_evaluate.1} parent=0 // pred_check_branch
    %18 = sbr.rel (0) target = $region9
  $region8: #{actor_critic_evaluate.1} parent=0 // pred_region
    _
  $region9: #{actor_critic_evaluate.1} parent=0 // pred_fallthru
    _
  // Predicated region
  $region10: #{actor_critic_evaluate.1} parent=0 // pred_check
    _
  $region11: #{actor_critic_evaluate.1} parent=0 // pred_check_branch
    %20 = sbr.rel (0) target = $region13
  $region12: #{actor_critic_evaluate.1} parent=0 // pred_region
    _
  $region13: #{actor_critic_evaluate.1} parent=0 // pred_fallthru
    _
  // Predicated region
  $region14: #{actor_critic_evaluate.1} parent=0 // pred_check
    _
  $region15: #{actor_critic_evaluate.1} parent=0 // pred_check_branch
    %22 = sbr.rel (0) target = $region17
  $region16: #{actor_critic_evaluate.1} parent=0 // pred_region
    _
  $region17: #{actor_critic_evaluate.1} parent=0 // pred_fallthru
    _
  // Predicated region
  $region18: #{actor_critic_evaluate.1} parent=0 // pred_check
    _
  $region19: #{actor_critic_evaluate.1} parent=0 // pred_check_branch
    %24 = sbr.rel (0) target = $region21
  $region20: #{actor_critic_evaluate.1} parent=0 // pred_region
    _
  $region21: #{actor_critic_evaluate.1} parent=0 // pred_fallthru
    _
  // Predicated region
  $region22: #{actor_critic_evaluate.1} parent=0 // pred_check
    _
  $region23: #{actor_critic_evaluate.1} parent=0 // pred_check_branch
    %26 = sbr.rel (0) target = $region25
  $region24: #{actor_critic_evaluate.1} parent=0 // pred_region
    _
  $region25: #{actor_critic_evaluate.1} parent=0 // pred_fallthru
    _
  // Predicated region
  $region26: #{actor_critic_evaluate.1} parent=0 // pred_check
    _
  $region27: #{actor_critic_evaluate.1} parent=0 // pred_check_branch
    %28 = sbr.rel (0) target = $region29
  $region28: #{actor_critic_evaluate.1} parent=0 // pred_region
    _
  $region29: #{actor_critic_evaluate.1} parent=0 // pred_fallthru
    _
  // Predicated region
  $region30: #{actor_critic_evaluate.1} parent=0 // pred_check
    _
  $region31: #{actor_critic_evaluate.1} parent=0 // pred_check_branch
    %30 = sbr.rel (0) target = $region33
  $region32: #{actor_critic_evaluate.1} parent=0 // pred_region
    _
  $region33: #{actor_critic_evaluate.1} parent=0 // pred_fallthru
    _
  // Predicated region
  $region34: #{actor_critic_evaluate.1} parent=0 // pred_check
    _
  $region35: #{actor_critic_evaluate.1} parent=0 // pred_check_branch
    %32 = sbr.rel (0) target = $region37
  $region36: #{actor_critic_evaluate.1} parent=0 // pred_region
    _
  $region37: #{actor_critic_evaluate.1} parent=0 // pred_fallthru
    _
  // Predicated region
  $region38: #{actor_critic_evaluate.1} parent=0 // pred_check
    _
  $region39: #{actor_critic_evaluate.1} parent=0 // pred_check_branch
    %34 = sbr.rel (0) target = $region41
  $region40: #{actor_critic_evaluate.1} parent=0 // pred_region
    _
  $region41: #{actor_critic_evaluate.1} parent=0 // pred_fallthru
    _
  %v35 = vld [vmem:[%s0] sm:$0xff]
  %v36 = vld [vmem:[%s0 + $0x8] sm:$0xff]
  %v37 = vld [vmem:[%s4] sm:$0xff]
  %v38 = vld [vmem:[%s4 + $0x8] sm:$0xff]
  %v39 = vld [vmem:[%s4 + $0x10] sm:$0xff]
  %v40 = vld [vmem:[%s4 + $0x18] sm:$0xff]
  %v41 = vld [vmem:[%s4 + $0x20] sm:$0xff]
  %v42 = vld [vmem:[%s4 + $0x28] sm:$0xff]
  %v43 = vld [vmem:[%s4 + $0x30] sm:$0xff]
  %v44 = vld [vmem:[%s4 + $0x38] sm:$0xff]
  %v45 = vld [vmem:[%s4 + $0x40] sm:$0xff]
  %v46 = vld [vmem:[%s4 + $0x48] sm:$0xff]
  %v47 = vld [vmem:[%s4 + $0x50] sm:$0xff]
  %v48 = vld [vmem:[%s4 + $0x58] sm:$0xff]
  %v49 = vld [vmem:[%s4 + $0x60] sm:$0xff]
  %v50 = vld [vmem:[%s4 + $0x68] sm:$0xff]
  %v51 = vld [vmem:[%s4 + $0x70] sm:$0xff]
  %v52 = vld [vmem:[%s4 + $0x78] sm:$0xff]
  %v53 = vld [vmem:[%s5] sm:$0xff]
  %v54 = vld [vmem:[%s5 + $0x8] sm:$0xff]
  %v55 = vld [vmem:[%s5 + $0x10] sm:$0xff]
  %v56 = vld [vmem:[%s5 + $0x18] sm:$0xff]
  %v57 = vld [vmem:[%s5 + $0x20] sm:$0xff]
  %v58 = vld [vmem:[%s5 + $0x28] sm:$0xff]
  %v59 = vld [vmem:[%s5 + $0x30] sm:$0xff]
  %v60 = vld [vmem:[%s5 + $0x38] sm:$0xff]
  %v61 = vld [vmem:[%s5 + $0x40] sm:$0xff]
  %v62 = vld [vmem:[%s5 + $0x48] sm:$0xff]
  %v63 = vld [vmem:[%s5 + $0x50] sm:$0xff]
  %v64 = vld [vmem:[%s5 + $0x58] sm:$0xff]
  %v65 = vld [vmem:[%s5 + $0x60] sm:$0xff]
  %v66 = vld [vmem:[%s5 + $0x68] sm:$0xff]
  %v67 = vld [vmem:[%s5 + $0x70] sm:$0xff]
  %v68 = vld [vmem:[%s5 + $0x78] sm:$0xff]
  %70 = vset.pattern.permute.xlu0 0
  %71 = vperm.xlu0 %70, %v53
  %v72 = vpop.permute.xlu0 %71
  %75 = vset.pattern.permute.xlu0 0
  %76 = vperm.xlu0 %75, %v54
  %v77 = vpop.permute.xlu0 %76
  %80 = vset.pattern.permute.xlu0 0
  %81 = vperm.xlu0 %80, %v55
  %v82 = vpop.permute.xlu0 %81
  %85 = vset.pattern.permute.xlu0 0
  %86 = vperm.xlu0 %85, %v56
  %v87 = vpop.permute.xlu0 %86
  %90 = vset.pattern.permute.xlu0 0
  %91 = vperm.xlu0 %90, %v57
  %v92 = vpop.permute.xlu0 %91
  %95 = vset.pattern.permute.xlu0 0
  %96 = vperm.xlu0 %95, %v58
  %v97 = vpop.permute.xlu0 %96
  %100 = vset.pattern.permute.xlu0 0
  %101 = vperm.xlu0 %100, %v59
  %v102 = vpop.permute.xlu0 %101
  %105 = vset.pattern.permute.xlu0 0
  %106 = vperm.xlu0 %105, %v60
  %v107 = vpop.permute.xlu0 %106
  %110 = vset.pattern.permute.xlu0 0
  %111 = vperm.xlu0 %110, %v61
  %v112 = vpop.permute.xlu0 %111
  %115 = vset.pattern.permute.xlu0 0
  %116 = vperm.xlu0 %115, %v62
  %v117 = vpop.permute.xlu0 %116
  %120 = vset.pattern.permute.xlu0 0
  %121 = vperm.xlu0 %120, %v63
  %v122 = vpop.permute.xlu0 %121
  %125 = vset.pattern.permute.xlu0 0
  %126 = vperm.xlu0 %125, %v64
  %v127 = vpop.permute.xlu0 %126
  %130 = vset.pattern.permute.xlu0 0
  %131 = vperm.xlu0 %130, %v65
  %v132 = vpop.permute.xlu0 %131
  %135 = vset.pattern.permute.xlu0 0
  %136 = vperm.xlu0 %135, %v66
  %v137 = vpop.permute.xlu0 %136
  %140 = vset.pattern.permute.xlu0 0
  %141 = vperm.xlu0 %140, %v67
  %v142 = vpop.permute.xlu0 %141
  %145 = vset.pattern.permute.xlu0 0
  %146 = vperm.xlu0 %145, %v68
  %v147 = vpop.permute.xlu0 %146
  %vm149 = vcmask 130048
  %v151 = vsel %vm149, %v37, 0
  %v154 = vsel %vm149, %v38, 0
  %v157 = vsel %vm149, %v39, 0
  %v160 = vsel %vm149, %v40, 0
  %v163 = vsel %vm149, %v41, 0
  %v166 = vsel %vm149, %v42, 0
  %v169 = vsel %vm149, %v43, 0
  %v172 = vsel %vm149, %v44, 0
  %v175 = vsel %vm149, %v45, 0
  %v178 = vsel %vm149, %v46, 0
  %v181 = vsel %vm149, %v47, 0
  %v184 = vsel %vm149, %v48, 0
  %v187 = vsel %vm149, %v49, 0
  %v190 = vsel %vm149, %v50, 0
  %v193 = vsel %vm149, %v51, 0
  %v196 = vsel %vm149, %v52, 0
  %198 = vmatprep.subr.mxu0 0.0
  %199 = vmatpush1.msra.mxu0 %v35
  %200 = vmatprep.subr.mxu0 0.0
  %201 = vmatpush1.msra.mxu0 %v36
  %202 = vmatprep.subr.mxu0 0.0
  %203 = vmatpush1.msra.mxu0 0.0
  %204 = vmatprep.subr.mxu0 0.0
  %205 = vmatpush1.msra.mxu0 0.0
  %206 = vmatprep.subr.mxu0 0.0
  %207 = vmatpush1.msra.mxu0 0.0
  %208 = vmatprep.subr.mxu0 0.0
  %209 = vmatpush1.msra.mxu0 0.0
  %210 = vmatprep.subr.mxu0 0.0
  %211 = vmatpush1.msra.mxu0 0.0
  %212 = vmatprep.subr.mxu0 0.0
  %213 = vmatpush1.msra.mxu0 0.0
  %214 = vmatprep.subr.mxu0 0.0
  %215 = vmatpush1.msra.mxu0 0.0
  %216 = vmatprep.subr.mxu0 0.0
  %217 = vmatpush1.msra.mxu0 0.0
  %218 = vmatprep.subr.mxu0 0.0
  %219 = vmatpush1.msra.mxu0 0.0
  %220 = vmatprep.subr.mxu0 0.0
  %221 = vmatpush1.msra.mxu0 0.0
  %222 = vmatprep.subr.mxu0 0.0
  %223 = vmatpush1.msra.mxu0 0.0
  %224 = vmatprep.subr.mxu0 0.0
  %225 = vmatpush1.msra.mxu0 0.0
  %226 = vmatprep.subr.mxu0 0.0
  %227 = vmatpush1.msra.mxu0 0.0
  %228 = vmatprep.subr.mxu0 0.0
  %229 = vmatpush1.msra.mxu0 0.0
  %230 = vmatprep.subr.mxu0 0.0
  %231 = vmatpush1.msra.mxu0 0.0
  %232 = vmatprep.subr.mxu0 0.0
  %233 = vmatpush1.msra.mxu0 0.0
  %234 = vmatprep.subr.mxu0 0.0
  %235 = vmatpush1.msra.mxu0 0.0
  %236 = vmatprep.subr.mxu0 0.0
  %237 = vmatpush1.msra.mxu0 0.0
  %238 = vmatprep.subr.mxu0 0.0
  %239 = vmatpush1.msra.mxu0 0.0
  %240 = vmatprep.subr.mxu0 0.0
  %241 = vmatpush1.msra.mxu0 0.0
  %242 = vmatprep.subr.mxu0 0.0
  %243 = vmatpush1.msra.mxu0 0.0
  %244 = vmatprep.subr.mxu0 0.0
  %245 = vmatpush1.msra.mxu0 0.0
  %246 = vmatprep.subr.mxu0 0.0
  %247 = vmatpush1.msra.mxu0 0.0
  %248 = vmatprep.subr.mxu0 0.0
  %249 = vmatpush1.msra.mxu0 0.0
  %250 = vmatprep.subr.mxu0 0.0
  %251 = vmatpush1.msra.mxu0 0.0
  %252 = vmatprep.subr.mxu0 0.0
  %253 = vmatpush1.msra.mxu0 0.0
  %254 = vmatprep.subr.mxu0 0.0
  %255 = vmatpush1.msra.mxu0 0.0
  %256 = vmatprep.subr.mxu0 0.0
  %257 = vmatpush1.msra.mxu0 0.0
  %258 = vmatprep.subr.mxu0 0.0
  %259 = vmatpush1.msra.mxu0 0.0
  %260 = vmatprep.subr.mxu0 0.0
  %261 = vmatpush1.msra.mxu0 0.0
  %262 = vmatprep.mubr.f32.mxu0 0.0
  %263 = vmatmul.mubr.f32.gmra.mrb[0].mxu0 %v151
  %v264 = vpop.f32.mrb[0].mxu0
  %v265 = vadd.f32 %v72, %v264
  %v266 = vpop.f32.mrb[0].mxu0
  %267 = vmatprep.mubr.f32.mxu0 0.0
  %268 = vmatmul.mubr.f32.gmra.mrb[0].mxu0 %v154
  %v269 = vpop.f32.mrb[0].mxu0
  %v270 = vadd.f32 %v77, %v269
  %v271 = vpop.f32.mrb[0].mxu0
  %272 = vmatprep.mubr.f32.mxu0 0.0
  %273 = vmatmul.mubr.f32.gmra.mrb[0].mxu0 %v157
  %v274 = vpop.f32.mrb[0].mxu0
  %v275 = vadd.f32 %v82, %v274
  %v276 = vpop.f32.mrb[0].mxu0
  %277 = vmatprep.mubr.f32.mxu0 0.0
  %278 = vmatmul.mubr.f32.gmra.mrb[0].mxu0 %v160
  %v279 = vpop.f32.mrb[0].mxu0
  %v280 = vadd.f32 %v87, %v279
  %v281 = vpop.f32.mrb[0].mxu0
  %282 = vmatprep.mubr.f32.mxu0 0.0
  %283 = vmatmul.mubr.f32.gmra.mrb[0].mxu0 %v163
  %v284 = vpop.f32.mrb[0].mxu0
  %v285 = vadd.f32 %v92, %v284
  %v286 = vpop.f32.mrb[0].mxu0
  %287 = vmatprep.mubr.f32.mxu0 0.0
  %288 = vmatmul.mubr.f32.gmra.mrb[0].mxu0 %v166
  %v289 = vpop.f32.mrb[0].mxu0
  %v290 = vadd.f32 %v97, %v289
  %v291 = vpop.f32.mrb[0].mxu0
  %292 = vmatprep.mubr.f32.mxu0 0.0
  %293 = vmatmul.mubr.f32.gmra.mrb[0].mxu0 %v169
  %v294 = vpop.f32.mrb[0].mxu0
  %v295 = vadd.f32 %v102, %v294
  %v296 = vpop.f32.mrb[0].mxu0
  %297 = vmatprep.mubr.f32.mxu0 0.0
  %298 = vmatmul.mubr.f32.gmra.mrb[0].mxu0 %v172
  %v299 = vpop.f32.mrb[0].mxu0
  %v300 = vadd.f32 %v107, %v299
  %v301 = vpop.f32.mrb[0].mxu0
  %302 = vmatprep.mubr.f32.mxu0 0.0
  %303 = vmatmul.mubr.f32.gmra.mrb[0].mxu0 %v175
  %v304 = vpop.f32.mrb[0].mxu0
  %v305 = vadd.f32 %v112, %v304
  %v306 = vpop.f32.mrb[0].mxu0
  %307 = vmatprep.mubr.f32.mxu0 0.0
  %308 = vmatmul.mubr.f32.gmra.mrb[0].mxu0 %v178
  %v309 = vpop.f32.mrb[0].mxu0
  %v310 = vadd.f32 %v117, %v309
  %v311 = vpop.f32.mrb[0].mxu0
  %312 = vmatprep.mubr.f32.mxu0 0.0
  %313 = vmatmul.mubr.f32.gmra.mrb[0].mxu0 %v181
  %v314 = vpop.f32.mrb[0].mxu0
  %v315 = vadd.f32 %v122, %v314
  %v316 = vpop.f32.mrb[0].mxu0
  %317 = vmatprep.mubr.f32.mxu0 0.0
  %318 = vmatmul.mubr.f32.gmra.mrb[0].mxu0 %v184
  %v319 = vpop.f32.mrb[0].mxu0
  %v320 = vadd.f32 %v127, %v319
  %v321 = vpop.f32.mrb[0].mxu0
  %322 = vmatprep.mubr.f32.mxu0 0.0
  %323 = vmatmul.mubr.f32.gmra.mrb[0].mxu0 %v187
  %v324 = vpop.f32.mrb[0].mxu0
  %v325 = vadd.f32 %v132, %v324
  %v326 = vpop.f32.mrb[0].mxu0
  %327 = vmatprep.mubr.f32.mxu0 0.0
  %328 = vmatmul.mubr.f32.gmra.mrb[0].mxu0 %v190
  %v329 = vpop.f32.mrb[0].mxu0
  %v330 = vadd.f32 %v137, %v329
  %v331 = vpop.f32.mrb[0].mxu0
  %332 = vmatprep.mubr.f32.mxu0 0.0
  %333 = vmatmul.mubr.f32.gmra.mrb[0].mxu0 %v193
  %v334 = vpop.f32.mrb[0].mxu0
  %v335 = vadd.f32 %v142, %v334
  %v336 = vpop.f32.mrb[0].mxu0
  %337 = vmatprep.mubr.f32.mxu0 0.0
  %338 = vmatmul.mubr.f32.gmra.mrb[0].mxu0 %v196
  %v339 = vpop.f32.mrb[0].mxu0
  %v340 = vadd.f32 %v147, %v339
  %v341 = vpop.f32.mrb[0].mxu0
  %342 = vdwg.mxu0
  %v343 = vtanh.pop %v265
  %v344 = vtanh.pop %v270
  %v345 = vtanh.pop %v275
  %v346 = vtanh.pop %v280
  %v347 = vtanh.pop %v285
  %v348 = vtanh.pop %v290
  %v349 = vtanh.pop %v295
  %v350 = vtanh.pop %v300
  %v351 = vtanh.pop %v305
  %v352 = vtanh.pop %v310
  %v353 = vtanh.pop %v315
  %v354 = vtanh.pop %v320
  %v355 = vtanh.pop %v325
  %v356 = vtanh.pop %v330
  %v357 = vtanh.pop %v335
  %v358 = vtanh.pop %v340
  %v359 = vld [vmem:[%s6] sm:$0xff]
  %v360 = vld [vmem:[%s6 + $0x8] sm:$0xff]
  %v361 = vld [vmem:[%s6 + $0x10] sm:$0xff]
  %v362 = vld [vmem:[%s6 + $0x18] sm:$0xff]
  %v363 = vld [vmem:[%s6 + $0x20] sm:$0xff]
  %v364 = vld [vmem:[%s6 + $0x28] sm:$0xff]
  %v365 = vld [vmem:[%s6 + $0x30] sm:$0xff]
  %v366 = vld [vmem:[%s6 + $0x38] sm:$0xff]
  %v367 = vld [vmem:[%s6 + $0x40] sm:$0xff]
  %v368 = vld [vmem:[%s6 + $0x48] sm:$0xff]
  %v369 = vld [vmem:[%s6 + $0x50] sm:$0xff]
  %v370 = vld [vmem:[%s6 + $0x58] sm:$0xff]
  %v371 = vld [vmem:[%s6 + $0x60] sm:$0xff]
  %v372 = vld [vmem:[%s6 + $0x68] sm:$0xff]
  %v373 = vld [vmem:[%s6 + $0x70] sm:$0xff]
  %v374 = vld [vmem:[%s6 + $0x78] sm:$0xff]
  %v375 = vld [vmem:[%s7] sm:$0xff]
  %v376 = vld [vmem:[%s7 + $0x8] sm:$0xff]
  %v377 = vld [vmem:[%s7 + $0x10] sm:$0xff]
  %v378 = vld [vmem:[%s7 + $0x18] sm:$0xff]
  %v379 = vld [vmem:[%s7 + $0x20] sm:$0xff]
  %v380 = vld [vmem:[%s7 + $0x28] sm:$0xff]
  %v381 = vld [vmem:[%s7 + $0x30] sm:$0xff]
  %v382 = vld [vmem:[%s7 + $0x38] sm:$0xff]
  %v383 = vld [vmem:[%s7 + $0x40] sm:$0xff]
  %v384 = vld [vmem:[%s7 + $0x48] sm:$0xff]
  %v385 = vld [vmem:[%s7 + $0x50] sm:$0xff]
  %v386 = vld [vmem:[%s7 + $0x58] sm:$0xff]
  %v387 = vld [vmem:[%s7 + $0x60] sm:$0xff]
  %v388 = vld [vmem:[%s7 + $0x68] sm:$0xff]
  %v389 = vld [vmem:[%s7 + $0x70] sm:$0xff]
  %v390 = vld [vmem:[%s7 + $0x78] sm:$0xff]
  %392 = vset.pattern.permute.xlu0 0
  %393 = vperm.xlu0 %392, %v375
  %v394 = vpop.permute.xlu0 %393
  %397 = vset.pattern.permute.xlu0 0
  %398 = vperm.xlu0 %397, %v376
  %v399 = vpop.permute.xlu0 %398
  %402 = vset.pattern.permute.xlu0 0
  %403 = vperm.xlu0 %402, %v377
  %v404 = vpop.permute.xlu0 %403
  %407 = vset.pattern.permute.xlu0 0
  %408 = vperm.xlu0 %407, %v378
  %v409 = vpop.permute.xlu0 %408
  %412 = vset.pattern.permute.xlu0 0
  %413 = vperm.xlu0 %412, %v379
  %v414 = vpop.permute.xlu0 %413
  %417 = vset.pattern.permute.xlu0 0
  %418 = vperm.xlu0 %417, %v380
  %v419 = vpop.permute.xlu0 %418
  %422 = vset.pattern.permute.xlu0 0
  %423 = vperm.xlu0 %422, %v381
  %v424 = vpop.permute.xlu0 %423
  %427 = vset.pattern.permute.xlu0 0
  %428 = vperm.xlu0 %427, %v382
  %v429 = vpop.permute.xlu0 %428
  %432 = vset.pattern.permute.xlu0 0
  %433 = vperm.xlu0 %432, %v383
  %v434 = vpop.permute.xlu0 %433
  %437 = vset.pattern.permute.xlu0 0
  %438 = vperm.xlu0 %437, %v384
  %v439 = vpop.permute.xlu0 %438
  %442 = vset.pattern.permute.xlu0 0
  %443 = vperm.xlu0 %442, %v385
  %v444 = vpop.permute.xlu0 %443
  %447 = vset.pattern.permute.xlu0 0
  %448 = vperm.xlu0 %447, %v386
  %v449 = vpop.permute.xlu0 %448
  %452 = vset.pattern.permute.xlu0 0
  %453 = vperm.xlu0 %452, %v387
  %v454 = vpop.permute.xlu0 %453
  %457 = vset.pattern.permute.xlu0 0
  %458 = vperm.xlu0 %457, %v388
  %v459 = vpop.permute.xlu0 %458
  %462 = vset.pattern.permute.xlu0 0
  %463 = vperm.xlu0 %462, %v389
  %v464 = vpop.permute.xlu0 %463
  %467 = vset.pattern.permute.xlu0 0
  %468 = vperm.xlu0 %467, %v390
  %v469 = vpop.permute.xlu0 %468
  %471 = vmatprep.subr.mxu0 0.0
  %472 = vmatpush1.msra.mxu0 %v343
  %473 = vmatprep.subr.mxu0 0.0
  %474 = vmatpush1.msra.mxu0 %v344
  %475 = vmatprep.subr.mxu0 0.0
  %476 = vmatpush1.msra.mxu0 %v345
  %477 = vmatprep.subr.mxu0 0.0
  %478 = vmatpush1.msra.mxu0 %v346
  %479 = vmatprep.subr.mxu0 0.0
  %480 = vmatpush1.msra.mxu0 %v347
  %481 = vmatprep.subr.mxu0 0.0
  %482 = vmatpush1.msra.mxu0 %v348
  %483 = vmatprep.subr.mxu0 0.0
  %484 = vmatpush1.msra.mxu0 %v349
  %485 = vmatprep.subr.mxu0 0.0
  %486 = vmatpush1.msra.mxu0 %v350
  %487 = vmatprep.subr.mxu0 0.0
  %488 = vmatpush1.msra.mxu0 %v351
  %489 = vmatprep.subr.mxu0 0.0
  %490 = vmatpush1.msra.mxu0 %v352
  %491 = vmatprep.subr.mxu0 0.0
  %492 = vmatpush1.msra.mxu0 %v353
  %493 = vmatprep.subr.mxu0 0.0
  %494 = vmatpush1.msra.mxu0 %v354
  %495 = vmatprep.subr.mxu0 0.0
  %496 = vmatpush1.msra.mxu0 %v355
  %497 = vmatprep.subr.mxu0 0.0
  %498 = vmatpush1.msra.mxu0 %v356
  %499 = vmatprep.subr.mxu0 0.0
  %500 = vmatpush1.msra.mxu0 %v357
  %501 = vmatprep.subr.mxu0 0.0
  %502 = vmatpush1.msra.mxu0 %v358
  %503 = vmatprep.subr.mxu0 0.0
  %504 = vmatpush1.msra.mxu0 0.0
  %505 = vmatprep.subr.mxu0 0.0
  %506 = vmatpush1.msra.mxu0 0.0
  %507 = vmatprep.subr.mxu0 0.0
  %508 = vmatpush1.msra.mxu0 0.0
  %509 = vmatprep.subr.mxu0 0.0
  %510 = vmatpush1.msra.mxu0 0.0
  %511 = vmatprep.subr.mxu0 0.0
  %512 = vmatpush1.msra.mxu0 0.0
  %513 = vmatprep.subr.mxu0 0.0
  %514 = vmatpush1.msra.mxu0 0.0
  %515 = vmatprep.subr.mxu0 0.0
  %516 = vmatpush1.msra.mxu0 0.0
  %517 = vmatprep.subr.mxu0 0.0
  %518 = vmatpush1.msra.mxu0 0.0
  %519 = vmatprep.subr.mxu0 0.0
  %520 = vmatpush1.msra.mxu0 0.0
  %521 = vmatprep.subr.mxu0 0.0
  %522 = vmatpush1.msra.mxu0 0.0
  %523 = vmatprep.subr.mxu0 0.0
  %524 = vmatpush1.msra.mxu0 0.0
  %525 = vmatprep.subr.mxu0 0.0
  %526 = vmatpush1.msra.mxu0 0.0
  %527 = vmatprep.subr.mxu0 0.0
  %528 = vmatpush1.msra.mxu0 0.0
  %529 = vmatprep.subr.mxu0 0.0
  %530 = vmatpush1.msra.mxu0 0.0
  %531 = vmatprep.subr.mxu0 0.0
  %532 = vmatpush1.msra.mxu0 0.0
  %533 = vmatprep.subr.mxu0 0.0
  %534 = vmatpush1.msra.mxu0 0.0
  %535 = vmatprep.mubr.f32.mxu0 0.0
  %536 = vmatmul.mubr.f32.gmra.mrb[0].mxu0 %v359
  %v537 = vpop.f32.mrb[0].mxu0
  %v538 = vadd.f32 %v394, %v537
  %v539 = vpop.f32.mrb[0].mxu0
  %540 = vmatprep.mubr.f32.mxu0 0.0
  %541 = vmatmul.mubr.f32.gmra.mrb[0].mxu0 %v360
  %v542 = vpop.f32.mrb[0].mxu0
  %v543 = vadd.f32 %v399, %v542
  %v544 = vpop.f32.mrb[0].mxu0
  %545 = vmatprep.mubr.f32.mxu0 0.0
  %546 = vmatmul.mubr.f32.gmra.mrb[0].mxu0 %v361
  %v547 = vpop.f32.mrb[0].mxu0
  %v548 = vadd.f32 %v404, %v547
  %v549 = vpop.f32.mrb[0].mxu0
  %550 = vmatprep.mubr.f32.mxu0 0.0
  %551 = vmatmul.mubr.f32.gmra.mrb[0].mxu0 %v362
  %v552 = vpop.f32.mrb[0].mxu0
  %v553 = vadd.f32 %v409, %v552
  %v554 = vpop.f32.mrb[0].mxu0
  %555 = vmatprep.mubr.f32.mxu0 0.0
  %556 = vmatmul.mubr.f32.gmra.mrb[0].mxu0 %v363
  %v557 = vpop.f32.mrb[0].mxu0
  %v558 = vadd.f32 %v414, %v557
  %v559 = vpop.f32.mrb[0].mxu0
  %560 = vmatprep.mubr.f32.mxu0 0.0
  %561 = vmatmul.mubr.f32.gmra.mrb[0].mxu0 %v364
  %v562 = vpop.f32.mrb[0].mxu0
  %v563 = vadd.f32 %v419, %v562
  %v564 = vpop.f32.mrb[0].mxu0
  %565 = vmatprep.mubr.f32.mxu0 0.0
  %566 = vmatmul.mubr.f32.gmra.mrb[0].mxu0 %v365
  %v567 = vpop.f32.mrb[0].mxu0
  %v568 = vadd.f32 %v424, %v567
  %v569 = vpop.f32.mrb[0].mxu0
  %570 = vmatprep.mubr.f32.mxu0 0.0
  %571 = vmatmul.mubr.f32.gmra.mrb[0].mxu0 %v366
  %v572 = vpop.f32.mrb[0].mxu0
  %v573 = vadd.f32 %v429, %v572
  %v574 = vpop.f32.mrb[0].mxu0
  %575 = vmatprep.mubr.f32.mxu0 0.0
  %576 = vmatmul.mubr.f32.gmra.mrb[0].mxu0 %v367
  %v577 = vpop.f32.mrb[0].mxu0
  %v578 = vadd.f32 %v434, %v577
  %v579 = vpop.f32.mrb[0].mxu0
  %580 = vmatprep.mubr.f32.mxu0 0.0
  %581 = vmatmul.mubr.f32.gmra.mrb[0].mxu0 %v368
  %v582 = vpop.f32.mrb[0].mxu0
  %v583 = vadd.f32 %v439, %v582
  %v584 = vpop.f32.mrb[0].mxu0
  %585 = vmatprep.mubr.f32.mxu0 0.0
  %586 = vmatmul.mubr.f32.gmra.mrb[0].mxu0 %v369
  %v587 = vpop.f32.mrb[0].mxu0
  %v588 = vadd.f32 %v444, %v587
  %v589 = vpop.f32.mrb[0].mxu0
  %590 = vmatprep.mubr.f32.mxu0 0.0
  %591 = vmatmul.mubr.f32.gmra.mrb[0].mxu0 %v370
  %v592 = vpop.f32.mrb[0].mxu0
  %v593 = vadd.f32 %v449, %v592
  %v594 = vpop.f32.mrb[0].mxu0
  %595 = vmatprep.mubr.f32.mxu0 0.0
  %596 = vmatmul.mubr.f32.gmra.mrb[0].mxu0 %v371
  %v597 = vpop.f32.mrb[0].mxu0
  %v598 = vadd.f32 %v454, %v597
  %v599 = vpop.f32.mrb[0].mxu0
  %600 = vmatprep.mubr.f32.mxu0 0.0
  %601 = vmatmul.mubr.f32.gmra.mrb[0].mxu0 %v372
  %v602 = vpop.f32.mrb[0].mxu0
  %v603 = vadd.f32 %v459, %v602
  %v604 = vpop.f32.mrb[0].mxu0
  %605 = vmatprep.mubr.f32.mxu0 0.0
  %606 = vmatmul.mubr.f32.gmra.mrb[0].mxu0 %v373
  %v607 = vpop.f32.mrb[0].mxu0
  %v608 = vadd.f32 %v464, %v607
  %v609 = vpop.f32.mrb[0].mxu0
  %610 = vmatprep.mubr.f32.mxu0 0.0
  %611 = vmatmul.mubr.f32.gmra.mrb[0].mxu0 %v374
  %v612 = vpop.f32.mrb[0].mxu0
  %v613 = vadd.f32 %v469, %v612
  %v614 = vpop.f32.mrb[0].mxu0
  %615 = vdwg.mxu0
  %v616 = vtanh.pop %v538
  %v617 = vtanh.pop %v543
  %v618 = vtanh.pop %v548
  %v619 = vtanh.pop %v553
  %v620 = vtanh.pop %v558
  %v621 = vtanh.pop %v563
  %v622 = vtanh.pop %v568
  %v623 = vtanh.pop %v573
  %v624 = vtanh.pop %v578
  %v625 = vtanh.pop %v583
  %v626 = vtanh.pop %v588
  %v627 = vtanh.pop %v593
  %v628 = vtanh.pop %v598
  %v629 = vtanh.pop %v603
  %v630 = vtanh.pop %v608
  %v631 = vtanh.pop %v613
  %v632 = vld [vmem:[%s8] sm:$0xff]
  %v633 = vld [vmem:[%s8 + $0x8] sm:$0xff]
  %v634 = vld [vmem:[%s9] sm:$0xff]
  %v635 = vld [vmem:[%s9 + $0x8] sm:$0xff]
  %637 = vset.pattern.permute.xlu0 0
  %638 = vperm.xlu0 %637, %v634
  %v639 = vpop.permute.xlu0 %638
  %642 = vset.pattern.permute.xlu0 0
  %643 = vperm.xlu0 %642, %v635
  %v644 = vpop.permute.xlu0 %643
  %646 = vmatprep.subr.mxu0 0.0
  %647 = vmatpush1.msra.mxu0 %v616
  %648 = vmatprep.subr.mxu0 0.0
  %649 = vmatpush1.msra.mxu0 %v617
  %650 = vmatprep.subr.mxu0 0.0
  %651 = vmatpush1.msra.mxu0 %v618
  %652 = vmatprep.subr.mxu0 0.0
  %653 = vmatpush1.msra.mxu0 %v619
  %654 = vmatprep.subr.mxu0 0.0
  %655 = vmatpush1.msra.mxu0 %v620
  %656 = vmatprep.subr.mxu0 0.0
  %657 = vmatpush1.msra.mxu0 %v621
  %658 = vmatprep.subr.mxu0 0.0
  %659 = vmatpush1.msra.mxu0 %v622
  %660 = vmatprep.subr.mxu0 0.0
  %661 = vmatpush1.msra.mxu0 %v623
  %662 = vmatprep.subr.mxu0 0.0
  %663 = vmatpush1.msra.mxu0 %v624
  %664 = vmatprep.subr.mxu0 0.0
  %665 = vmatpush1.msra.mxu0 %v625
  %666 = vmatprep.subr.mxu0 0.0
  %667 = vmatpush1.msra.mxu0 %v626
  %668 = vmatprep.subr.mxu0 0.0
  %669 = vmatpush1.msra.mxu0 %v627
  %670 = vmatprep.subr.mxu0 0.0
  %671 = vmatpush1.msra.mxu0 %v628
  %672 = vmatprep.subr.mxu0 0.0
  %673 = vmatpush1.msra.mxu0 %v629
  %674 = vmatprep.subr.mxu0 0.0
  %675 = vmatpush1.msra.mxu0 %v630
  %676 = vmatprep.subr.mxu0 0.0
  %677 = vmatpush1.msra.mxu0 %v631
  %678 = vmatprep.subr.mxu0 0.0
  %679 = vmatpush1.msra.mxu0 0.0
  %680 = vmatprep.subr.mxu0 0.0
  %681 = vmatpush1.msra.mxu0 0.0
  %682 = vmatprep.subr.mxu0 0.0
  %683 = vmatpush1.msra.mxu0 0.0
  %684 = vmatprep.subr.mxu0 0.0
  %685 = vmatpush1.msra.mxu0 0.0
  %686 = vmatprep.subr.mxu0 0.0
  %687 = vmatpush1.msra.mxu0 0.0
  %688 = vmatprep.subr.mxu0 0.0
  %689 = vmatpush1.msra.mxu0 0.0
  %690 = vmatprep.subr.mxu0 0.0
  %691 = vmatpush1.msra.mxu0 0.0
  %692 = vmatprep.subr.mxu0 0.0
  %693 = vmatpush1.msra.mxu0 0.0
  %694 = vmatprep.subr.mxu0 0.0
  %695 = vmatpush1.msra.mxu0 0.0
  %696 = vmatprep.subr.mxu0 0.0
  %697 = vmatpush1.msra.mxu0 0.0
  %698 = vmatprep.subr.mxu0 0.0
  %699 = vmatpush1.msra.mxu0 0.0
  %700 = vmatprep.subr.mxu0 0.0
  %701 = vmatpush1.msra.mxu0 0.0
  %702 = vmatprep.subr.mxu0 0.0
  %703 = vmatpush1.msra.mxu0 0.0
  %704 = vmatprep.subr.mxu0 0.0
  %705 = vmatpush1.msra.mxu0 0.0
  %706 = vmatprep.subr.mxu0 0.0
  %707 = vmatpush1.msra.mxu0 0.0
  %708 = vmatprep.subr.mxu0 0.0
  %709 = vmatpush1.msra.mxu0 0.0
  %710 = vmatprep.mubr.f32.mxu0 0.0
  %711 = vmatmul.mubr.f32.gmra.mrb[0].mxu0 %v632
  %v712 = vpop.f32.mrb[0].mxu0
  %v713 = vadd.f32 %v639, %v712
  %v714 = vpop.f32.mrb[0].mxu0
  %715 = vmatprep.mubr.f32.mxu0 0.0
  %716 = vmatmul.mubr.f32.gmra.mrb[0].mxu0 %v633
  %v717 = vpop.f32.mrb[0].mxu0
  %v718 = vadd.f32 %v644, %v717
  %v719 = vpop.f32.mrb[0].mxu0
  %720 = vdwg.mxu0
  %v721 = vtanh.pop %v713
  %v722 = vtanh.pop %v718
  %v723 = vld [vmem:[%s1] sm:$0xf]
  %v724 = vsub.f32 %v723, %v722
  %v725 = vmul.f32 %v724, %v724
  %v726 = vld [vmem:[%s2] sm:$0xf]
  %728 = vset.pattern.permute.xlu0 0
  %729 = vperm.xlu0 %728, %v726
  %v730 = vpop.permute.xlu0 %729
  %v732 = vmul.f32 %v725, %v730
  %vm733 = vcmask 1043456
  %v734 = vsel %vm733, %v732, 0.0
  %v735 = vrot.slane %v734, 4
  %v736 = vadd.f32 %v734, %v735
  %v737 = vrot.slane %v736, 2
  %v738 = vadd.f32 %v736, %v737
  %v739 = vrot.slane %v738, 1
  %v740 = vadd.f32 %v738, %v739
  %v741 = vld [vmem:[%s3] sm:$0xff]
  %743 = vset.pattern.permute.xlu0 0
  %744 = vperm.xlu0 %743, %v741
  %v745 = vpop.permute.xlu0 %744
  %v747 = vmul.f32 %v745, %v740
  %v748 = vadd.f32 %v721, %v747
  %749 = vst [vmem:[%s10] sm:$0xff] %v748
  // Predicated region
  $region42: #{actor_critic_evaluate.1} parent=0 // pred_check
    _
  $region43: #{actor_critic_evaluate.1} parent=0 // pred_check_branch
    %751 = sbr.rel (0) target = $region45
  $region44: #{actor_critic_evaluate.1} parent=0 // pred_region
    _
  $region45: #{actor_critic_evaluate.1} parent=0 // pred_fallthru
    _
  // Predicated region
  $region46: #{actor_critic_evaluate.1} parent=0 // pred_check
    _
  $region47: #{actor_critic_evaluate.1} parent=0 // pred_check_branch
    %753 = sbr.rel (0) target = $region49
  $region48: #{actor_critic_evaluate.1} parent=0 // pred_region
    _
  $region49: #{actor_critic_evaluate.1} parent=0 // pred_fallthru
    _

</llo_original>
